<compile_context>
chip_gen: v5e
topology: v5e:2x2
jax: 0.10.0
libtpu: 0.0.40
codegen_flags: <defaults>
</compile_context>

<pallas_src>
import functools

import jax
import jax.numpy as jnp
from jax import lax
from jax.experimental import pallas as pl
from jax.experimental.pallas import tpu as pltpu


# ----------------------------------------------------------------------------
# Model constants
# ----------------------------------------------------------------------------
IN_FEATS, HIDDEN, NUM_CLASSES = 1433, 64, 7
K_ITERS, ALPHA = 10, 0.1

SUBLANE, LANE = 8, 128
IN_FEATS_PAD = 1536       # next multiple of 128 >= 1433 (lane-aligned contraction)
CLASSES_PAD = 128         # lane-dense class dimension inside the kernel
NEG_BIG = -1e30           # mask value for padded class lanes (finite: no inf-inf)


def _round_up(v, m):
    return (v + m - 1) // m * m


# ----------------------------------------------------------------------------
# Fused kernel: lin1+relu -> lin2 -> APPNP(K, alpha) -> log_softmax
# ----------------------------------------------------------------------------
def _fused_appnp_kernel(x_ref, w1_ref, b1_ref, w2_ref, b2_ref, a_ref, o_ref,
                        *, num_iters, alpha, num_classes):
    # --- lin1 + ReLU (MXU matmul, f32 accumulation) ---
    h1 = jnp.dot(x_ref[...], w1_ref[...], preferred_element_type=jnp.float32)
    h1 = jnp.maximum(h1 + b1_ref[...], 0.0)                 # (N, HIDDEN)

    # --- lin2, class dim lane-padded to 128 (padded cols are exactly 0) ---
    h = jnp.dot(h1, w2_ref[...], preferred_element_type=jnp.float32)
    h = h + b2_ref[...]                                     # (N, 128)

    # --- APPNP power iteration; invariants hoisted out of the loop ---
    a_scaled = (1.0 - alpha) * a_ref[...]                   # (N, N)
    alpha_h = alpha * h                                     # (N, 128)

    def body(_, z):
        return jnp.dot(a_scaled, z, preferred_element_type=jnp.float32) + alpha_h

    z = lax.fori_loop(0, num_iters, body, h, unroll=True)

    # --- log_softmax over the first `num_classes` lanes only ---
    lane_idx = lax.broadcasted_iota(jnp.int32, z.shape, 1)
    valid = lane_idx < num_classes
    zm = jnp.where(valid, z, NEG_BIG)
    m = jnp.max(zm, axis=1, keepdims=True)
    e = jnp.where(valid, jnp.exp(zm - m), 0.0)
    lse = jnp.log(jnp.sum(e, axis=1, keepdims=True))
    # Lane-dense store of the full (N, 128) slab; padded cols sliced off outside.
    o_ref[...] = (z - m - lse).astype(o_ref.dtype)


# ----------------------------------------------------------------------------
# Wrapper: zero-pad to TPU-friendly shapes, single pallas_call, slice result
# ----------------------------------------------------------------------------
def appnp_model_forward(params, x, a_hat):
    n = x.shape[0]
    n_pad = _round_up(n, SUBLANE)

    x_pad = jnp.zeros((n_pad, IN_FEATS_PAD), jnp.float32).at[:n, :IN_FEATS].set(x)
    a_pad = jnp.zeros((n_pad, n_pad), jnp.float32).at[:n, :n].set(a_hat)
    w1_pad = jnp.zeros((IN_FEATS_PAD, HIDDEN), jnp.float32).at[:IN_FEATS, :].set(
        params["w1"])
    b1_2d = params["b1"].reshape(1, HIDDEN).astype(jnp.float32)
    w2_pad = jnp.zeros((HIDDEN, CLASSES_PAD), jnp.float32).at[:, :NUM_CLASSES].set(
        params["w2"])
    b2_pad = jnp.zeros((1, CLASSES_PAD), jnp.float32).at[0, :NUM_CLASSES].set(
        params["b2"])

    vmem_spec = pl.BlockSpec(memory_space=pltpu.MemorySpace.VMEM)
    out_pad = pl.pallas_call(
        functools.partial(_fused_appnp_kernel, num_iters=K_ITERS, alpha=ALPHA,
                          num_classes=NUM_CLASSES),
        out_shape=jax.ShapeDtypeStruct((n_pad, CLASSES_PAD), jnp.float32),
        in_specs=[vmem_spec] * 6,
        out_specs=vmem_spec,
    )(x_pad, w1_pad, b1_2d, w2_pad, b2_pad, a_pad)

    return out_pad[:n, :NUM_CLASSES]


# ----------------------------------------------------------------------------
# Glue: gcn-normalized dense adjacency (plain JAX, not a hot path)
# ----------------------------------------------------------------------------
def build_norm_adj(edge_index, num_nodes):
    src = edge_index[0]
    dst = edge_index[1]
    a = jnp.zeros((num_nodes, num_nodes), jnp.float32)
    a = a.at[dst, src].add(1.0)                             # A[target, source]
    a = a + jnp.eye(num_nodes, dtype=jnp.float32)           # self loops
    deg = jnp.sum(a, axis=1)
    d_inv_sqrt = lax.rsqrt(deg)                             # deg >= 1
    return a * d_inv_sqrt[:, None] * d_inv_sqrt[None, :]


# ----------------------------------------------------------------------------
# Parameters
# ----------------------------------------------------------------------------
def init_params(key):
    k1, k2, k3, k4 = jax.random.split(key, 4)

    def linear_init(kw, kb, fan_in, fan_out):
        bound = 1.0 / jnp.sqrt(jnp.float32(fan_in))
        w = jax.random.uniform(kw, (fan_in, fan_out), jnp.float32, -bound, bound)
        b = jax.random.uniform(kb, (fan_out,), jnp.float32, -bound, bound)
        return w, b

    w1, b1 = linear_init(k1, k2, IN_FEATS, HIDDEN)
    w2, b2 = linear_init(k3, k4, HIDDEN, NUM_CLASSES)
    return {"w1": w1, "b1": b1, "w2": w2, "b2": b2}


# Pure-JAX reference for correctness check (eval mode: dropout is identity).
def reference_forward(params, x, a_hat):
    h = jnp.maximum(x @ params["w1"] + params["b1"], 0.0)
    h = h @ params["w2"] + params["b2"]
    out = h
    for _ in range(K_ITERS):
        out = (1.0 - ALPHA) * (a_hat @ out) + ALPHA * h
    return jax.nn.log_softmax(out, axis=1)


if __name__ == "__main__":
    key = jax.random.PRNGKey(0)
    k_param, k_x = jax.random.split(key)

    N = 32  # small synthetic graph
    params = init_params(k_param)
    x = jax.random.normal(k_x, (N, IN_FEATS), jnp.float32)

    # Symmetric ring graph: i <-> i+1 (mod N), edge_index shape [2, 2N].
    idx = jnp.arange(N, dtype=jnp.int32)
    nxt = (idx + 1) % N
    edge_index = jnp.stack(
        [jnp.concatenate([idx, nxt]), jnp.concatenate([nxt, idx])], axis=0
    )
    a_hat = build_norm_adj(edge_index, N)

    fwd = jax.jit(appnp_model_forward)
    out = jax.block_until_ready(fwd(params, x, a_hat))

    ref = reference_forward(params, x, a_hat)
    assert out.shape == (N, NUM_CLASSES)
    assert jnp.allclose(out, ref, atol=1e-4, rtol=1e-4), float(
        jnp.max(jnp.abs(out - ref)))

    # TODO(synk): F.dropout(p=0.5) is the identity in eval mode; training-mode
    # stochastic dropout is not implemented.
    print("KERNEL_OK")
</pallas_src>

<mosaic_0001>
module attributes {stable_mosaic.version = 11 : i64} {
  func.func @_fused_appnp_kernel(%arg0: memref<32x1536xf32, #tpu.memory_space<vmem>>, %arg1: memref<1536x64xf32, #tpu.memory_space<vmem>>, %arg2: memref<1x64xf32, #tpu.memory_space<vmem>>, %arg3: memref<64x128xf32, #tpu.memory_space<vmem>>, %arg4: memref<1x128xf32, #tpu.memory_space<vmem>>, %arg5: memref<32x32xf32, #tpu.memory_space<vmem>>, %arg6: memref<32x128xf32, #tpu.memory_space<vmem>>) attributes {dimension_semantics = [], scalar_prefetch = 0 : i64, scratch_operands = 0 : i64, tpu.core_type = #tpu.core_type<tc>} {
    %c0 = arith.constant 0 : index
    %c0_0 = arith.constant 0 : index
    %0 = vector.load %arg0[%c0, %c0_0] : memref<32x1536xf32, #tpu.memory_space<vmem>>, vector<32x1536xf32>
    %c0_1 = arith.constant 0 : index
    %c0_2 = arith.constant 0 : index
    %1 = vector.load %arg1[%c0_1, %c0_2] : memref<1536x64xf32, #tpu.memory_space<vmem>>, vector<1536x64xf32>
    %cst = arith.constant dense<0.000000e+00> : vector<32x64xf32>
    %2 = tpu.matmul %0, %1, %cst {dimension_numbers = #tpu.dot_dimension_numbers<[1], [0], [0], [1], [0, 0, 1, 1], [], []>} : vector<32x1536xf32>, vector<1536x64xf32>, vector<32x64xf32> -> vector<32x64xf32>
    %c0_3 = arith.constant 0 : index
    %c0_4 = arith.constant 0 : index
    %3 = vector.load %arg2[%c0_3, %c0_4] : memref<1x64xf32, #tpu.memory_space<vmem>>, vector<1x64xf32>
    %4 = vector.broadcast %3 : vector<1x64xf32> to vector<32x64xf32>
    %5 = arith.addf %2, %4 : vector<32x64xf32>
    %cst_5 = arith.constant 0.000000e+00 : f32
    %6 = vector.broadcast %cst_5 : f32 to vector<32x64xf32>
    %7 = arith.maximumf %5, %6 : vector<32x64xf32>
    %c0_6 = arith.constant 0 : index
    %c0_7 = arith.constant 0 : index
    %8 = vector.load %arg3[%c0_6, %c0_7] : memref<64x128xf32, #tpu.memory_space<vmem>>, vector<64x128xf32>
    %cst_8 = arith.constant dense<0.000000e+00> : vector<32x128xf32>
    %9 = tpu.matmul %7, %8, %cst_8 {dimension_numbers = #tpu.dot_dimension_numbers<[1], [0], [0], [1], [0, 0, 1, 1], [], []>} : vector<32x64xf32>, vector<64x128xf32>, vector<32x128xf32> -> vector<32x128xf32>
    %c0_9 = arith.constant 0 : index
    %c0_10 = arith.constant 0 : index
    %10 = vector.load %arg4[%c0_9, %c0_10] : memref<1x128xf32, #tpu.memory_space<vmem>>, vector<1x128xf32>
    %11 = vector.broadcast %10 : vector<1x128xf32> to vector<32x128xf32>
    %12 = arith.addf %9, %11 : vector<32x128xf32>
    %c0_11 = arith.constant 0 : index
    %c0_12 = arith.constant 0 : index
    %13 = vector.load %arg5[%c0_11, %c0_12] : memref<32x32xf32, #tpu.memory_space<vmem>>, vector<32x32xf32>
    %cst_13 = arith.constant 0.899999976 : f32
    %14 = vector.broadcast %cst_13 : f32 to vector<32x32xf32>
    %15 = arith.mulf %14, %13 : vector<32x32xf32>
    %cst_14 = arith.constant 1.000000e-01 : f32
    %16 = vector.broadcast %cst_14 : f32 to vector<32x128xf32>
    %17 = arith.mulf %16, %12 : vector<32x128xf32>
    %c0_i32 = arith.constant 0 : i32
    %cst_15 = arith.constant dense<0.000000e+00> : vector<32x128xf32>
    %18 = tpu.matmul %15, %12, %cst_15 {dimension_numbers = #tpu.dot_dimension_numbers<[1], [0], [0], [1], [0, 0, 1, 1], [], []>} : vector<32x32xf32>, vector<32x128xf32>, vector<32x128xf32> -> vector<32x128xf32>
    %19 = arith.addf %18, %17 : vector<32x128xf32>
    %c1_i32 = arith.constant 1 : i32
    %cst_16 = arith.constant dense<0.000000e+00> : vector<32x128xf32>
    %20 = tpu.matmul %15, %19, %cst_16 {dimension_numbers = #tpu.dot_dimension_numbers<[1], [0], [0], [1], [0, 0, 1, 1], [], []>} : vector<32x32xf32>, vector<32x128xf32>, vector<32x128xf32> -> vector<32x128xf32>
    %21 = arith.addf %20, %17 : vector<32x128xf32>
    %c2_i32 = arith.constant 2 : i32
    %cst_17 = arith.constant dense<0.000000e+00> : vector<32x128xf32>
    %22 = tpu.matmul %15, %21, %cst_17 {dimension_numbers = #tpu.dot_dimension_numbers<[1], [0], [0], [1], [0, 0, 1, 1], [], []>} : vector<32x32xf32>, vector<32x128xf32>, vector<32x128xf32> -> vector<32x128xf32>
    %23 = arith.addf %22, %17 : vector<32x128xf32>
    %c3_i32 = arith.constant 3 : i32
    %cst_18 = arith.constant dense<0.000000e+00> : vector<32x128xf32>
    %24 = tpu.matmul %15, %23, %cst_18 {dimension_numbers = #tpu.dot_dimension_numbers<[1], [0], [0], [1], [0, 0, 1, 1], [], []>} : vector<32x32xf32>, vector<32x128xf32>, vector<32x128xf32> -> vector<32x128xf32>
    %25 = arith.addf %24, %17 : vector<32x128xf32>
    %c4_i32 = arith.constant 4 : i32
    %cst_19 = arith.constant dense<0.000000e+00> : vector<32x128xf32>
    %26 = tpu.matmul %15, %25, %cst_19 {dimension_numbers = #tpu.dot_dimension_numbers<[1], [0], [0], [1], [0, 0, 1, 1], [], []>} : vector<32x32xf32>, vector<32x128xf32>, vector<32x128xf32> -> vector<32x128xf32>
    %27 = arith.addf %26, %17 : vector<32x128xf32>
    %c5_i32 = arith.constant 5 : i32
    %cst_20 = arith.constant dense<0.000000e+00> : vector<32x128xf32>
    %28 = tpu.matmul %15, %27, %cst_20 {dimension_numbers = #tpu.dot_dimension_numbers<[1], [0], [0], [1], [0, 0, 1, 1], [], []>} : vector<32x32xf32>, vector<32x128xf32>, vector<32x128xf32> -> vector<32x128xf32>
    %29 = arith.addf %28, %17 : vector<32x128xf32>
    %c6_i32 = arith.constant 6 : i32
    %cst_21 = arith.constant dense<0.000000e+00> : vector<32x128xf32>
    %30 = tpu.matmul %15, %29, %cst_21 {dimension_numbers = #tpu.dot_dimension_numbers<[1], [0], [0], [1], [0, 0, 1, 1], [], []>} : vector<32x32xf32>, vector<32x128xf32>, vector<32x128xf32> -> vector<32x128xf32>
    %31 = arith.addf %30, %17 : vector<32x128xf32>
    %c7_i32 = arith.constant 7 : i32
    %cst_22 = arith.constant dense<0.000000e+00> : vector<32x128xf32>
    %32 = tpu.matmul %15, %31, %cst_22 {dimension_numbers = #tpu.dot_dimension_numbers<[1], [0], [0], [1], [0, 0, 1, 1], [], []>} : vector<32x32xf32>, vector<32x128xf32>, vector<32x128xf32> -> vector<32x128xf32>
    %33 = arith.addf %32, %17 : vector<32x128xf32>
    %c8_i32 = arith.constant 8 : i32
    %cst_23 = arith.constant dense<0.000000e+00> : vector<32x128xf32>
    %34 = tpu.matmul %15, %33, %cst_23 {dimension_numbers = #tpu.dot_dimension_numbers<[1], [0], [0], [1], [0, 0, 1, 1], [], []>} : vector<32x32xf32>, vector<32x128xf32>, vector<32x128xf32> -> vector<32x128xf32>
    %35 = arith.addf %34, %17 : vector<32x128xf32>
    %c9_i32 = arith.constant 9 : i32
    %cst_24 = arith.constant dense<0.000000e+00> : vector<32x128xf32>
    %36 = tpu.matmul %15, %35, %cst_24 {dimension_numbers = #tpu.dot_dimension_numbers<[1], [0], [0], [1], [0, 0, 1, 1], [], []>} : vector<32x32xf32>, vector<32x128xf32>, vector<32x128xf32> -> vector<32x128xf32>
    %37 = arith.addf %36, %17 : vector<32x128xf32>
    %38 = tpu.iota {dimensions = array<i32: 1>} : vector<32x128xi32>
    %c7_i32_25 = arith.constant 7 : i32
    %39 = vector.broadcast %c7_i32_25 : i32 to vector<32x128xi32>
    %40 = arith.cmpi slt, %38, %39 : vector<32x128xi32>
    %cst_26 = arith.constant -1.000000e+30 : f32
    %41 = vector.broadcast %cst_26 : f32 to vector<32x128xf32>
    %42 = arith.select %40, %37, %41 : vector<32x128xi1>, vector<32x128xf32>
    %cst_27 = arith.constant dense<0xFF800000> : vector<32xf32>
    %43 = vector.multi_reduction <maximumf>, %42, %cst_27 [1] : vector<32x128xf32> to vector<32xf32>
    %44 = vector.shape_cast %43 : vector<32xf32> to vector<32x1xf32>
    %45 = vector.broadcast %44 : vector<32x1xf32> to vector<32x128xf32>
    %46 = arith.subf %42, %45 : vector<32x128xf32>
    %47 = math.exp %46 : vector<32x128xf32>
    %cst_28 = arith.constant 0.000000e+00 : f32
    %48 = vector.broadcast %cst_28 : f32 to vector<32x128xf32>
    %49 = arith.select %40, %47, %48 : vector<32x128xi1>, vector<32x128xf32>
    %cst_29 = arith.constant dense<0.000000e+00> : vector<32xf32>
    %50 = vector.multi_reduction <add>, %49, %cst_29 [1] : vector<32x128xf32> to vector<32xf32>
    %51 = vector.shape_cast %50 : vector<32xf32> to vector<32x1xf32>
    %52 = math.log %51 : vector<32x1xf32>
    %53 = vector.broadcast %44 : vector<32x1xf32> to vector<32x128xf32>
    %54 = arith.subf %37, %53 : vector<32x128xf32>
    %55 = vector.broadcast %52 : vector<32x1xf32> to vector<32x128xf32>
    %56 = arith.subf %54, %55 : vector<32x128xf32>
    %c0_30 = arith.constant 0 : index
    %c0_31 = arith.constant 0 : index
    %57 = vector.load %arg6[%c0_30, %c0_31] : memref<32x128xf32, #tpu.memory_space<vmem>>, vector<32x128xf32>
    tpu.vector_store %arg6[%c0_30, %c0_31], %56 {strides = array<i32>} : memref<32x128xf32, #tpu.memory_space<vmem>>, vector<32x128xf32>,
    return
  }
}

</mosaic_0001>

<llo_original>
// kernel: appnp_model_forward.1
$region0: #{appnp_model_forward.1}
  #allocation0 [shape = 'u32[]', space=smem, size = 0x4, offset = 0x4, fixed_abs, tag = 'smem constant byte address 0x4 - core index']
  #allocation1 [shape = 'u32[72,128]{1,0:T(1,128)}', space=vmem, size = 0x9000, scoped, tag = 'internal scratch']
  %s0 = inlined_call_operand.vmem [shape: f32[32,1536], index: 0, kind: input, shape index: {}]
  %s1 = inlined_call_operand.vmem [shape: f32[1536,64], index: 1, kind: input, shape index: {}]
  %s2 = inlined_call_operand.vmem [shape: f32[1,64], index: 2, kind: input, shape index: {}]
  %s3 = inlined_call_operand.vmem [shape: f32[64,128], index: 3, kind: input, shape index: {}]
  %s4 = inlined_call_operand.vmem [shape: f32[1,128], index: 4, kind: input, shape index: {}]
  %s5 = inlined_call_operand.vmem [shape: f32[32,32], index: 5, kind: input, shape index: {}]
  %s6 = inlined_call_operand.vmem [shape: f32[32,128], index: 6, kind: output, shape index: {}]
  %s7 = sld [smem:[#allocation0]]
  $region34: #{appnp_model_forward.1} parent=0
    _
  %s9 = ssub.s32 1, %s7
  %s10 = scalar_select 0, %s9, %s7
  // Predicated region
  $region2: #{appnp_model_forward.1} parent=0 // pred_check
    _
  $region3: #{appnp_model_forward.1} parent=0 // pred_check_branch
    %12 = sbr.rel (0) target = $region5
  $region4: #{appnp_model_forward.1} parent=0 // pred_region
    _
  $region5: #{appnp_model_forward.1} parent=0 // pred_fallthru
    _
  // Predicated region
  $region6: #{appnp_model_forward.1} parent=0 // pred_check
    _
  $region7: #{appnp_model_forward.1} parent=0 // pred_check_branch
    %14 = sbr.rel (0) target = $region9
  $region8: #{appnp_model_forward.1} parent=0 // pred_region
    _
  $region9: #{appnp_model_forward.1} parent=0 // pred_fallthru
    _
  // Predicated region
  $region10: #{appnp_model_forward.1} parent=0 // pred_check
    _
  $region11: #{appnp_model_forward.1} parent=0 // pred_check_branch
    %16 = sbr.rel (0) target = $region13
  $region12: #{appnp_model_forward.1} parent=0 // pred_region
    _
  $region13: #{appnp_model_forward.1} parent=0 // pred_fallthru
    _
  // Predicated region
  $region14: #{appnp_model_forward.1} parent=0 // pred_check
    _
  $region15: #{appnp_model_forward.1} parent=0 // pred_check_branch
    %18 = sbr.rel (0) target = $region17
  $region16: #{appnp_model_forward.1} parent=0 // pred_region
    _
  $region17: #{appnp_model_forward.1} parent=0 // pred_fallthru
    _
  // Predicated region
  $region18: #{appnp_model_forward.1} parent=0 // pred_check
    _
  $region19: #{appnp_model_forward.1} parent=0 // pred_check_branch
    %20 = sbr.rel (0) target = $region21
  $region20: #{appnp_model_forward.1} parent=0 // pred_region
    _
  $region21: #{appnp_model_forward.1} parent=0 // pred_fallthru
    _
  // Predicated region
  $region22: #{appnp_model_forward.1} parent=0 // pred_check
    _
  $region23: #{appnp_model_forward.1} parent=0 // pred_check_branch
    %22 = sbr.rel (0) target = $region25
  $region24: #{appnp_model_forward.1} parent=0 // pred_region
    _
  $region25: #{appnp_model_forward.1} parent=0 // pred_fallthru
    _
  %v23 = vld [vmem:[%s0] sm:$0xff]
  %v24 = vld [vmem:[%s0 + $0x8] sm:$0xff]
  %v25 = vld [vmem:[%s0 + $0x10] sm:$0xff]
  %v26 = vld [vmem:[%s0 + $0x18] sm:$0xff]
  %v27 = vld [vmem:[%s0 + $0x20] sm:$0xff]
  %v28 = vld [vmem:[%s0 + $0x28] sm:$0xff]
  %v29 = vld [vmem:[%s0 + $0x30] sm:$0xff]
  %v30 = vld [vmem:[%s0 + $0x38] sm:$0xff]
  %v31 = vld [vmem:[%s0 + $0x40] sm:$0xff]
  %v32 = vld [vmem:[%s0 + $0x48] sm:$0xff]
  %v33 = vld [vmem:[%s0 + $0x50] sm:$0xff]
  %v34 = vld [vmem:[%s0 + $0x58] sm:$0xff]
  %v35 = vld [vmem:[%s0 + $0x60] sm:$0xff]
  %v36 = vld [vmem:[%s0 + $0x68] sm:$0xff]
  %v37 = vld [vmem:[%s0 + $0x70] sm:$0xff]
  %v38 = vld [vmem:[%s0 + $0x78] sm:$0xff]
  %v39 = vld [vmem:[%s0 + $0x80] sm:$0xff]
  %v40 = vld [vmem:[%s0 + $0x88] sm:$0xff]
  %v41 = vld [vmem:[%s0 + $0x90] sm:$0xff]
  %v42 = vld [vmem:[%s0 + $0x98] sm:$0xff]
  %v43 = vld [vmem:[%s0 + $0xa0] sm:$0xff]
  %v44 = vld [vmem:[%s0 + $0xa8] sm:$0xff]
  %v45 = vld [vmem:[%s0 + $0xb0] sm:$0xff]
  %v46 = vld [vmem:[%s0 + $0xb8] sm:$0xff]
  %v47 = vld [vmem:[%s0 + $0xc0] sm:$0xff]
  %v48 = vld [vmem:[%s0 + $0xc8] sm:$0xff]
  %v49 = vld [vmem:[%s0 + $0xd0] sm:$0xff]
  %v50 = vld [vmem:[%s0 + $0xd8] sm:$0xff]
  %v51 = vld [vmem:[%s0 + $0xe0] sm:$0xff]
  %v52 = vld [vmem:[%s0 + $0xe8] sm:$0xff]
  %v53 = vld [vmem:[%s0 + $0xf0] sm:$0xff]
  %v54 = vld [vmem:[%s0 + $0xf8] sm:$0xff]
  %v55 = vld [vmem:[%s0 + $0x100] sm:$0xff]
  %v56 = vld [vmem:[%s0 + $0x108] sm:$0xff]
  %v57 = vld [vmem:[%s0 + $0x110] sm:$0xff]
  %v58 = vld [vmem:[%s0 + $0x118] sm:$0xff]
  %v59 = vld [vmem:[%s0 + $0x120] sm:$0xff]
  %v60 = vld [vmem:[%s0 + $0x128] sm:$0xff]
  %v61 = vld [vmem:[%s0 + $0x130] sm:$0xff]
  %v62 = vld [vmem:[%s0 + $0x138] sm:$0xff]
  %v63 = vld [vmem:[%s0 + $0x140] sm:$0xff]
  %v64 = vld [vmem:[%s0 + $0x148] sm:$0xff]
  %v65 = vld [vmem:[%s0 + $0x150] sm:$0xff]
  %v66 = vld [vmem:[%s0 + $0x158] sm:$0xff]
  %v67 = vld [vmem:[%s0 + $0x160] sm:$0xff]
  %v68 = vld [vmem:[%s0 + $0x168] sm:$0xff]
  %v69 = vld [vmem:[%s0 + $0x170] sm:$0xff]
  %v70 = vld [vmem:[%s0 + $0x178] sm:$0xff]
  %v71 = vld [vmem:[%s1] sm:$0xff]
  %v72 = vld [vmem:[%s1 + $0x8] sm:$0xff]
  %v73 = vld [vmem:[%s1 + $0x10] sm:$0xff]
  %v74 = vld [vmem:[%s1 + $0x18] sm:$0xff]
  %v75 = vld [vmem:[%s1 + $0x20] sm:$0xff]
  %v76 = vld [vmem:[%s1 + $0x28] sm:$0xff]
  %v77 = vld [vmem:[%s1 + $0x30] sm:$0xff]
  %v78 = vld [vmem:[%s1 + $0x38] sm:$0xff]
  %v79 = vld [vmem:[%s1 + $0x40] sm:$0xff]
  %v80 = vld [vmem:[%s1 + $0x48] sm:$0xff]
  %v81 = vld [vmem:[%s1 + $0x50] sm:$0xff]
  %v82 = vld [vmem:[%s1 + $0x58] sm:$0xff]
  %v83 = vld [vmem:[%s1 + $0x60] sm:$0xff]
  %v84 = vld [vmem:[%s1 + $0x68] sm:$0xff]
  %v85 = vld [vmem:[%s1 + $0x70] sm:$0xff]
  %v86 = vld [vmem:[%s1 + $0x78] sm:$0xff]
  %v87 = vld [vmem:[%s1 + $0x80] sm:$0xff]
  %v88 = vld [vmem:[%s1 + $0x88] sm:$0xff]
  %v89 = vld [vmem:[%s1 + $0x90] sm:$0xff]
  %v90 = vld [vmem:[%s1 + $0x98] sm:$0xff]
  %v91 = vld [vmem:[%s1 + $0xa0] sm:$0xff]
  %v92 = vld [vmem:[%s1 + $0xa8] sm:$0xff]
  %v93 = vld [vmem:[%s1 + $0xb0] sm:$0xff]
  %v94 = vld [vmem:[%s1 + $0xb8] sm:$0xff]
  %v95 = vld [vmem:[%s1 + $0xc0] sm:$0xff]
  %v96 = vld [vmem:[%s1 + $0xc8] sm:$0xff]
  %v97 = vld [vmem:[%s1 + $0xd0] sm:$0xff]
  %v98 = vld [vmem:[%s1 + $0xd8] sm:$0xff]
  %v99 = vld [vmem:[%s1 + $0xe0] sm:$0xff]
  %v100 = vld [vmem:[%s1 + $0xe8] sm:$0xff]
  %v101 = vld [vmem:[%s1 + $0xf0] sm:$0xff]
  %v102 = vld [vmem:[%s1 + $0xf8] sm:$0xff]
  %v103 = vld [vmem:[%s1 + $0x100] sm:$0xff]
  %v104 = vld [vmem:[%s1 + $0x108] sm:$0xff]
  %v105 = vld [vmem:[%s1 + $0x110] sm:$0xff]
  %v106 = vld [vmem:[%s1 + $0x118] sm:$0xff]
  %v107 = vld [vmem:[%s1 + $0x120] sm:$0xff]
  %v108 = vld [vmem:[%s1 + $0x128] sm:$0xff]
  %v109 = vld [vmem:[%s1 + $0x130] sm:$0xff]
  %v110 = vld [vmem:[%s1 + $0x138] sm:$0xff]
  %v111 = vld [vmem:[%s1 + $0x140] sm:$0xff]
  %v112 = vld [vmem:[%s1 + $0x148] sm:$0xff]
  %v113 = vld [vmem:[%s1 + $0x150] sm:$0xff]
  %v114 = vld [vmem:[%s1 + $0x158] sm:$0xff]
  %v115 = vld [vmem:[%s1 + $0x160] sm:$0xff]
  %v116 = vld [vmem:[%s1 + $0x168] sm:$0xff]
  %v117 = vld [vmem:[%s1 + $0x170] sm:$0xff]
  %v118 = vld [vmem:[%s1 + $0x178] sm:$0xff]
  %v119 = vld [vmem:[%s1 + $0x180] sm:$0xff]
  %v120 = vld [vmem:[%s1 + $0x188] sm:$0xff]
  %v121 = vld [vmem:[%s1 + $0x190] sm:$0xff]
  %v122 = vld [vmem:[%s1 + $0x198] sm:$0xff]
  %v123 = vld [vmem:[%s1 + $0x1a0] sm:$0xff]
  %v124 = vld [vmem:[%s1 + $0x1a8] sm:$0xff]
  %v125 = vld [vmem:[%s1 + $0x1b0] sm:$0xff]
  %v126 = vld [vmem:[%s1 + $0x1b8] sm:$0xff]
  %v127 = vld [vmem:[%s1 + $0x1c0] sm:$0xff]
  %v128 = vld [vmem:[%s1 + $0x1c8] sm:$0xff]
  %v129 = vld [vmem:[%s1 + $0x1d0] sm:$0xff]
  %v130 = vld [vmem:[%s1 + $0x1d8] sm:$0xff]
  %v131 = vld [vmem:[%s1 + $0x1e0] sm:$0xff]
  %v132 = vld [vmem:[%s1 + $0x1e8] sm:$0xff]
  %v133 = vld [vmem:[%s1 + $0x1f0] sm:$0xff]
  %v134 = vld [vmem:[%s1 + $0x1f8] sm:$0xff]
  %v135 = vld [vmem:[%s1 + $0x200] sm:$0xff]
  %v136 = vld [vmem:[%s1 + $0x208] sm:$0xff]
  %v137 = vld [vmem:[%s1 + $0x210] sm:$0xff]
  %v138 = vld [vmem:[%s1 + $0x218] sm:$0xff]
  %v139 = vld [vmem:[%s1 + $0x220] sm:$0xff]
  %v140 = vld [vmem:[%s1 + $0x228] sm:$0xff]
  %v141 = vld [vmem:[%s1 + $0x230] sm:$0xff]
  %v142 = vld [vmem:[%s1 + $0x238] sm:$0xff]
  %v143 = vld [vmem:[%s1 + $0x240] sm:$0xff]
  %v144 = vld [vmem:[%s1 + $0x248] sm:$0xff]
  %v145 = vld [vmem:[%s1 + $0x250] sm:$0xff]
  %v146 = vld [vmem:[%s1 + $0x258] sm:$0xff]
  %v147 = vld [vmem:[%s1 + $0x260] sm:$0xff]
  %v148 = vld [vmem:[%s1 + $0x268] sm:$0xff]
  %v149 = vld [vmem:[%s1 + $0x270] sm:$0xff]
  %v150 = vld [vmem:[%s1 + $0x278] sm:$0xff]
  %v151 = vld [vmem:[%s1 + $0x280] sm:$0xff]
  %v152 = vld [vmem:[%s1 + $0x288] sm:$0xff]
  %v153 = vld [vmem:[%s1 + $0x290] sm:$0xff]
  %v154 = vld [vmem:[%s1 + $0x298] sm:$0xff]
  %v155 = vld [vmem:[%s1 + $0x2a0] sm:$0xff]
  %v156 = vld [vmem:[%s1 + $0x2a8] sm:$0xff]
  %v157 = vld [vmem:[%s1 + $0x2b0] sm:$0xff]
  %v158 = vld [vmem:[%s1 + $0x2b8] sm:$0xff]
  %v159 = vld [vmem:[%s1 + $0x2c0] sm:$0xff]
  %v160 = vld [vmem:[%s1 + $0x2c8] sm:$0xff]
  %v161 = vld [vmem:[%s1 + $0x2d0] sm:$0xff]
  %v162 = vld [vmem:[%s1 + $0x2d8] sm:$0xff]
  %v163 = vld [vmem:[%s1 + $0x2e0] sm:$0xff]
  %v164 = vld [vmem:[%s1 + $0x2e8] sm:$0xff]
  %v165 = vld [vmem:[%s1 + $0x2f0] sm:$0xff]
  %v166 = vld [vmem:[%s1 + $0x2f8] sm:$0xff]
  %v167 = vld [vmem:[%s1 + $0x300] sm:$0xff]
  %v168 = vld [vmem:[%s1 + $0x308] sm:$0xff]
  %v169 = vld [vmem:[%s1 + $0x310] sm:$0xff]
  %v170 = vld [vmem:[%s1 + $0x318] sm:$0xff]
  %v171 = vld [vmem:[%s1 + $0x320] sm:$0xff]
  %v172 = vld [vmem:[%s1 + $0x328] sm:$0xff]
  %v173 = vld [vmem:[%s1 + $0x330] sm:$0xff]
  %v174 = vld [vmem:[%s1 + $0x338] sm:$0xff]
  %v175 = vld [vmem:[%s1 + $0x340] sm:$0xff]
  %v176 = vld [vmem:[%s1 + $0x348] sm:$0xff]
  %v177 = vld [vmem:[%s1 + $0x350] sm:$0xff]
  %v178 = vld [vmem:[%s1 + $0x358] sm:$0xff]
  %v179 = vld [vmem:[%s1 + $0x360] sm:$0xff]
  %v180 = vld [vmem:[%s1 + $0x368] sm:$0xff]
  %v181 = vld [vmem:[%s1 + $0x370] sm:$0xff]
  %v182 = vld [vmem:[%s1 + $0x378] sm:$0xff]
  %v183 = vld [vmem:[%s1 + $0x380] sm:$0xff]
  %v184 = vld [vmem:[%s1 + $0x388] sm:$0xff]
  %v185 = vld [vmem:[%s1 + $0x390] sm:$0xff]
  %v186 = vld [vmem:[%s1 + $0x398] sm:$0xff]
  %v187 = vld [vmem:[%s1 + $0x3a0] sm:$0xff]
  %v188 = vld [vmem:[%s1 + $0x3a8] sm:$0xff]
  %v189 = vld [vmem:[%s1 + $0x3b0] sm:$0xff]
  %v190 = vld [vmem:[%s1 + $0x3b8] sm:$0xff]
  %v191 = vld [vmem:[%s1 + $0x3c0] sm:$0xff]
  %v192 = vld [vmem:[%s1 + $0x3c8] sm:$0xff]
  %v193 = vld [vmem:[%s1 + $0x3d0] sm:$0xff]
  %v194 = vld [vmem:[%s1 + $0x3d8] sm:$0xff]
  %v195 = vld [vmem:[%s1 + $0x3e0] sm:$0xff]
  %v196 = vld [vmem:[%s1 + $0x3e8] sm:$0xff]
  %v197 = vld [vmem:[%s1 + $0x3f0] sm:$0xff]
  %v198 = vld [vmem:[%s1 + $0x3f8] sm:$0xff]
  %v199 = vld [vmem:[%s1 + $0x400] sm:$0xff]
  %v200 = vld [vmem:[%s1 + $0x408] sm:$0xff]
  %v201 = vld [vmem:[%s1 + $0x410] sm:$0xff]
  %v202 = vld [vmem:[%s1 + $0x418] sm:$0xff]
  %v203 = vld [vmem:[%s1 + $0x420] sm:$0xff]
  %v204 = vld [vmem:[%s1 + $0x428] sm:$0xff]
  %v205 = vld [vmem:[%s1 + $0x430] sm:$0xff]
  %v206 = vld [vmem:[%s1 + $0x438] sm:$0xff]
  %v207 = vld [vmem:[%s1 + $0x440] sm:$0xff]
  %v208 = vld [vmem:[%s1 + $0x448] sm:$0xff]
  %v209 = vld [vmem:[%s1 + $0x450] sm:$0xff]
  %v210 = vld [vmem:[%s1 + $0x458] sm:$0xff]
  %v211 = vld [vmem:[%s1 + $0x460] sm:$0xff]
  %v212 = vld [vmem:[%s1 + $0x468] sm:$0xff]
  %v213 = vld [vmem:[%s1 + $0x470] sm:$0xff]
  %v214 = vld [vmem:[%s1 + $0x478] sm:$0xff]
  %v215 = vld [vmem:[%s1 + $0x480] sm:$0xff]
  %v216 = vld [vmem:[%s1 + $0x488] sm:$0xff]
  %v217 = vld [vmem:[%s1 + $0x490] sm:$0xff]
  %v218 = vld [vmem:[%s1 + $0x498] sm:$0xff]
  %v219 = vld [vmem:[%s1 + $0x4a0] sm:$0xff]
  %v220 = vld [vmem:[%s1 + $0x4a8] sm:$0xff]
  %v221 = vld [vmem:[%s1 + $0x4b0] sm:$0xff]
  %v222 = vld [vmem:[%s1 + $0x4b8] sm:$0xff]
  %v223 = vld [vmem:[%s1 + $0x4c0] sm:$0xff]
  %v224 = vld [vmem:[%s1 + $0x4c8] sm:$0xff]
  %v225 = vld [vmem:[%s1 + $0x4d0] sm:$0xff]
  %v226 = vld [vmem:[%s1 + $0x4d8] sm:$0xff]
  %v227 = vld [vmem:[%s1 + $0x4e0] sm:$0xff]
  %v228 = vld [vmem:[%s1 + $0x4e8] sm:$0xff]
  %v229 = vld [vmem:[%s1 + $0x4f0] sm:$0xff]
  %v230 = vld [vmem:[%s1 + $0x4f8] sm:$0xff]
  %v231 = vld [vmem:[%s1 + $0x500] sm:$0xff]
  %v232 = vld [vmem:[%s1 + $0x508] sm:$0xff]
  %v233 = vld [vmem:[%s1 + $0x510] sm:$0xff]
  %v234 = vld [vmem:[%s1 + $0x518] sm:$0xff]
  %v235 = vld [vmem:[%s1 + $0x520] sm:$0xff]
  %v236 = vld [vmem:[%s1 + $0x528] sm:$0xff]
  %v237 = vld [vmem:[%s1 + $0x530] sm:$0xff]
  %v238 = vld [vmem:[%s1 + $0x538] sm:$0xff]
  %v239 = vld [vmem:[%s1 + $0x540] sm:$0xff]
  %v240 = vld [vmem:[%s1 + $0x548] sm:$0xff]
  %v241 = vld [vmem:[%s1 + $0x550] sm:$0xff]
  %v242 = vld [vmem:[%s1 + $0x558] sm:$0xff]
  %v243 = vld [vmem:[%s1 + $0x560] sm:$0xff]
  %v244 = vld [vmem:[%s1 + $0x568] sm:$0xff]
  %v245 = vld [vmem:[%s1 + $0x570] sm:$0xff]
  %v246 = vld [vmem:[%s1 + $0x578] sm:$0xff]
  %v247 = vld [vmem:[%s1 + $0x580] sm:$0xff]
  %v248 = vld [vmem:[%s1 + $0x588] sm:$0xff]
  %v249 = vld [vmem:[%s1 + $0x590] sm:$0xff]
  %v250 = vld [vmem:[%s1 + $0x598] sm:$0xff]
  %v251 = vld [vmem:[%s1 + $0x5a0] sm:$0xff]
  %v252 = vld [vmem:[%s1 + $0x5a8] sm:$0xff]
  %v253 = vld [vmem:[%s1 + $0x5b0] sm:$0xff]
  %v254 = vld [vmem:[%s1 + $0x5b8] sm:$0xff]
  %v255 = vld [vmem:[%s1 + $0x5c0] sm:$0xff]
  %v256 = vld [vmem:[%s1 + $0x5c8] sm:$0xff]
  %v257 = vld [vmem:[%s1 + $0x5d0] sm:$0xff]
  %v258 = vld [vmem:[%s1 + $0x5d8] sm:$0xff]
  %v259 = vld [vmem:[%s1 + $0x5e0] sm:$0xff]
  %v260 = vld [vmem:[%s1 + $0x5e8] sm:$0xff]
  %v261 = vld [vmem:[%s1 + $0x5f0] sm:$0xff]
  %v262 = vld [vmem:[%s1 + $0x5f8] sm:$0xff]
  %v263 = vld [vmem:[%s2] sm:$0x1]
  %v265 = vperm.slane %v263, 0
  %267 = vmatpush.msra.mxu0 %v86
  %268 = vmatpush.msra.mxu0 %v85
  %269 = vmatpush.msra.mxu0 %v84
  %270 = vmatpush.msra.mxu0 %v83
  %271 = vmatpush.msra.mxu0 %v82
  %272 = vmatpush.msra.mxu0 %v81
  %273 = vmatpush.msra.mxu0 %v80
  %274 = vmatpush.msra.mxu0 %v79
  %275 = vmatpush.msra.mxu0 %v78
  %276 = vmatpush.msra.mxu0 %v77
  %277 = vmatpush.msra.mxu0 %v76
  %278 = vmatpush.msra.mxu0 %v75
  %279 = vmatpush.msra.mxu0 %v74
  %280 = vmatpush.msra.mxu0 %v73
  %281 = vmatpush.msra.mxu0 %v72
  %282 = vmatpush.msra.mxu0 %v71
  %283 = vmatmul.f32.gmra.mxu0 %v23
  %v284 = vpop.f32.mrf.mxu0
  %v285 = vadd.f32 %v265, %v284
  %286 = vmatmul.f32.gmra.mxu0 %v35
  %v287 = vpop.f32.mrf.mxu0
  %v288 = vadd.f32 %v265, %v287
  %289 = vmatmul.f32.gmra.mxu0 %v47
  %v290 = vpop.f32.mrf.mxu0
  %v291 = vadd.f32 %v265, %v290
  %292 = vmatmul.f32.gmra.mxu0 %v59
  %v293 = vpop.f32.mrf.mxu0
  %v294 = vadd.f32 %v265, %v293
  %295 = vdwg.mxu0
  %296 = vmatpush.msra.mxu0 %v102
  %297 = vmatpush.msra.mxu0 %v101
  %298 = vmatpush.msra.mxu0 %v100
  %299 = vmatpush.msra.mxu0 %v99
  %300 = vmatpush.msra.mxu0 %v98
  %301 = vmatpush.msra.mxu0 %v97
  %302 = vmatpush.msra.mxu0 %v96
  %303 = vmatpush.msra.mxu0 %v95
  %304 = vmatpush.msra.mxu0 %v94
  %305 = vmatpush.msra.mxu0 %v93
  %306 = vmatpush.msra.mxu0 %v92
  %307 = vmatpush.msra.mxu0 %v91
  %308 = vmatpush.msra.mxu0 %v90
  %309 = vmatpush.msra.mxu0 %v89
  %310 = vmatpush.msra.mxu0 %v88
  %311 = vmatpush.msra.mxu0 %v87
  %312 = vmatmul.f32.gmra.mxu0 %v24
  %v313 = vpop.f32.mrf.mxu0
  %v314 = vadd.f32 %v285, %v313
  %315 = vmatmul.f32.gmra.mxu0 %v36
  %v316 = vpop.f32.mrf.mxu0
  %v317 = vadd.f32 %v288, %v316
  %318 = vmatmul.f32.gmra.mxu0 %v48
  %v319 = vpop.f32.mrf.mxu0
  %v320 = vadd.f32 %v291, %v319
  %321 = vmatmul.f32.gmra.mxu0 %v60
  %v322 = vpop.f32.mrf.mxu0
  %v323 = vadd.f32 %v294, %v322
  %324 = vdwg.mxu0
  %325 = vmatpush.msra.mxu0 %v118
  %326 = vmatpush.msra.mxu0 %v117
  %327 = vmatpush.msra.mxu0 %v116
  %328 = vmatpush.msra.mxu0 %v115
  %329 = vmatpush.msra.mxu0 %v114
  %330 = vmatpush.msra.mxu0 %v113
  %331 = vmatpush.msra.mxu0 %v112
  %332 = vmatpush.msra.mxu0 %v111
  %333 = vmatpush.msra.mxu0 %v110
  %334 = vmatpush.msra.mxu0 %v109
  %335 = vmatpush.msra.mxu0 %v108
  %336 = vmatpush.msra.mxu0 %v107
  %337 = vmatpush.msra.mxu0 %v106
  %338 = vmatpush.msra.mxu0 %v105
  %339 = vmatpush.msra.mxu0 %v104
  %340 = vmatpush.msra.mxu0 %v103
  %341 = vmatmul.f32.gmra.mxu0 %v25
  %v342 = vpop.f32.mrf.mxu0
  %v343 = vadd.f32 %v314, %v342
  %344 = vmatmul.f32.gmra.mxu0 %v37
  %v345 = vpop.f32.mrf.mxu0
  %v346 = vadd.f32 %v317, %v345
  %347 = vmatmul.f32.gmra.mxu0 %v49
  %v348 = vpop.f32.mrf.mxu0
  %v349 = vadd.f32 %v320, %v348
  %350 = vmatmul.f32.gmra.mxu0 %v61
  %v351 = vpop.f32.mrf.mxu0
  %v352 = vadd.f32 %v323, %v351
  %353 = vdwg.mxu0
  %354 = vmatpush.msra.mxu0 %v134
  %355 = vmatpush.msra.mxu0 %v133
  %356 = vmatpush.msra.mxu0 %v132
  %357 = vmatpush.msra.mxu0 %v131
  %358 = vmatpush.msra.mxu0 %v130
  %359 = vmatpush.msra.mxu0 %v129
  %360 = vmatpush.msra.mxu0 %v128
  %361 = vmatpush.msra.mxu0 %v127
  %362 = vmatpush.msra.mxu0 %v126
  %363 = vmatpush.msra.mxu0 %v125
  %364 = vmatpush.msra.mxu0 %v124
  %365 = vmatpush.msra.mxu0 %v123
  %366 = vmatpush.msra.mxu0 %v122
  %367 = vmatpush.msra.mxu0 %v121
  %368 = vmatpush.msra.mxu0 %v120
  %369 = vmatpush.msra.mxu0 %v119
  %370 = vmatmul.f32.gmra.mxu0 %v26
  %v371 = vpop.f32.mrf.mxu0
  %v372 = vadd.f32 %v343, %v371
  %373 = vmatmul.f32.gmra.mxu0 %v38
  %v374 = vpop.f32.mrf.mxu0
  %v375 = vadd.f32 %v346, %v374
  %376 = vmatmul.f32.gmra.mxu0 %v50
  %v377 = vpop.f32.mrf.mxu0
  %v378 = vadd.f32 %v349, %v377
  %379 = vmatmul.f32.gmra.mxu0 %v62
  %v380 = vpop.f32.mrf.mxu0
  %v381 = vadd.f32 %v352, %v380
  %382 = vdwg.mxu0
  %383 = vmatpush.msra.mxu0 %v150
  %384 = vmatpush.msra.mxu0 %v149
  %385 = vmatpush.msra.mxu0 %v148
  %386 = vmatpush.msra.mxu0 %v147
  %387 = vmatpush.msra.mxu0 %v146
  %388 = vmatpush.msra.mxu0 %v145
  %389 = vmatpush.msra.mxu0 %v144
  %390 = vmatpush.msra.mxu0 %v143
  %391 = vmatpush.msra.mxu0 %v142
  %392 = vmatpush.msra.mxu0 %v141
  %393 = vmatpush.msra.mxu0 %v140
  %394 = vmatpush.msra.mxu0 %v139
  %395 = vmatpush.msra.mxu0 %v138
  %396 = vmatpush.msra.mxu0 %v137
  %397 = vmatpush.msra.mxu0 %v136
  %398 = vmatpush.msra.mxu0 %v135
  %399 = vmatmul.f32.gmra.mxu0 %v27
  %v400 = vpop.f32.mrf.mxu0
  %v401 = vadd.f32 %v372, %v400
  %402 = vmatmul.f32.gmra.mxu0 %v39
  %v403 = vpop.f32.mrf.mxu0
  %v404 = vadd.f32 %v375, %v403
  %405 = vmatmul.f32.gmra.mxu0 %v51
  %v406 = vpop.f32.mrf.mxu0
  %v407 = vadd.f32 %v378, %v406
  %408 = vmatmul.f32.gmra.mxu0 %v63
  %v409 = vpop.f32.mrf.mxu0
  %v410 = vadd.f32 %v381, %v409
  %411 = vdwg.mxu0
  %412 = vmatpush.msra.mxu0 %v166
  %413 = vmatpush.msra.mxu0 %v165
  %414 = vmatpush.msra.mxu0 %v164
  %415 = vmatpush.msra.mxu0 %v163
  %416 = vmatpush.msra.mxu0 %v162
  %417 = vmatpush.msra.mxu0 %v161
  %418 = vmatpush.msra.mxu0 %v160
  %419 = vmatpush.msra.mxu0 %v159
  %420 = vmatpush.msra.mxu0 %v158
  %421 = vmatpush.msra.mxu0 %v157
  %422 = vmatpush.msra.mxu0 %v156
  %423 = vmatpush.msra.mxu0 %v155
  %424 = vmatpush.msra.mxu0 %v154
  %425 = vmatpush.msra.mxu0 %v153
  %426 = vmatpush.msra.mxu0 %v152
  %427 = vmatpush.msra.mxu0 %v151
  %428 = vmatmul.f32.gmra.mxu0 %v28
  %v429 = vpop.f32.mrf.mxu0
  %v430 = vadd.f32 %v401, %v429
  %431 = vmatmul.f32.gmra.mxu0 %v40
  %v432 = vpop.f32.mrf.mxu0
  %v433 = vadd.f32 %v404, %v432
  %434 = vmatmul.f32.gmra.mxu0 %v52
  %v435 = vpop.f32.mrf.mxu0
  %v436 = vadd.f32 %v407, %v435
  %437 = vmatmul.f32.gmra.mxu0 %v64
  %v438 = vpop.f32.mrf.mxu0
  %v439 = vadd.f32 %v410, %v438
  %440 = vdwg.mxu0
  %441 = vmatpush.msra.mxu0 %v182
  %442 = vmatpush.msra.mxu0 %v181
  %443 = vmatpush.msra.mxu0 %v180
  %444 = vmatpush.msra.mxu0 %v179
  %445 = vmatpush.msra.mxu0 %v178
  %446 = vmatpush.msra.mxu0 %v177
  %447 = vmatpush.msra.mxu0 %v176
  %448 = vmatpush.msra.mxu0 %v175
  %449 = vmatpush.msra.mxu0 %v174
  %450 = vmatpush.msra.mxu0 %v173
  %451 = vmatpush.msra.mxu0 %v172
  %452 = vmatpush.msra.mxu0 %v171
  %453 = vmatpush.msra.mxu0 %v170
  %454 = vmatpush.msra.mxu0 %v169
  %455 = vmatpush.msra.mxu0 %v168
  %456 = vmatpush.msra.mxu0 %v167
  %457 = vmatmul.f32.gmra.mxu0 %v29
  %v458 = vpop.f32.mrf.mxu0
  %v459 = vadd.f32 %v430, %v458
  %460 = vmatmul.f32.gmra.mxu0 %v41
  %v461 = vpop.f32.mrf.mxu0
  %v462 = vadd.f32 %v433, %v461
  %463 = vmatmul.f32.gmra.mxu0 %v53
  %v464 = vpop.f32.mrf.mxu0
  %v465 = vadd.f32 %v436, %v464
  %466 = vmatmul.f32.gmra.mxu0 %v65
  %v467 = vpop.f32.mrf.mxu0
  %v468 = vadd.f32 %v439, %v467
  %469 = vdwg.mxu0
  %470 = vmatpush.msra.mxu0 %v198
  %471 = vmatpush.msra.mxu0 %v197
  %472 = vmatpush.msra.mxu0 %v196
  %473 = vmatpush.msra.mxu0 %v195
  %474 = vmatpush.msra.mxu0 %v194
  %475 = vmatpush.msra.mxu0 %v193
  %476 = vmatpush.msra.mxu0 %v192
  %477 = vmatpush.msra.mxu0 %v191
  %478 = vmatpush.msra.mxu0 %v190
  %479 = vmatpush.msra.mxu0 %v189
  %480 = vmatpush.msra.mxu0 %v188
  %481 = vmatpush.msra.mxu0 %v187
  %482 = vmatpush.msra.mxu0 %v186
  %483 = vmatpush.msra.mxu0 %v185
  %484 = vmatpush.msra.mxu0 %v184
  %485 = vmatpush.msra.mxu0 %v183
  %486 = vmatmul.f32.gmra.mxu0 %v30
  %v487 = vpop.f32.mrf.mxu0
  %v488 = vadd.f32 %v459, %v487
  %489 = vmatmul.f32.gmra.mxu0 %v42
  %v490 = vpop.f32.mrf.mxu0
  %v491 = vadd.f32 %v462, %v490
  %492 = vmatmul.f32.gmra.mxu0 %v54
  %v493 = vpop.f32.mrf.mxu0
  %v494 = vadd.f32 %v465, %v493
  %495 = vmatmul.f32.gmra.mxu0 %v66
  %v496 = vpop.f32.mrf.mxu0
  %v497 = vadd.f32 %v468, %v496
  %498 = vdwg.mxu0
  %499 = vmatpush.msra.mxu0 %v214
  %500 = vmatpush.msra.mxu0 %v213
  %501 = vmatpush.msra.mxu0 %v212
  %502 = vmatpush.msra.mxu0 %v211
  %503 = vmatpush.msra.mxu0 %v210
  %504 = vmatpush.msra.mxu0 %v209
  %505 = vmatpush.msra.mxu0 %v208
  %506 = vmatpush.msra.mxu0 %v207
  %507 = vmatpush.msra.mxu0 %v206
  %508 = vmatpush.msra.mxu0 %v205
  %509 = vmatpush.msra.mxu0 %v204
  %510 = vmatpush.msra.mxu0 %v203
  %511 = vmatpush.msra.mxu0 %v202
  %512 = vmatpush.msra.mxu0 %v201
  %513 = vmatpush.msra.mxu0 %v200
  %514 = vmatpush.msra.mxu0 %v199
  %515 = vmatmul.f32.gmra.mxu0 %v31
  %v516 = vpop.f32.mrf.mxu0
  %v517 = vadd.f32 %v488, %v516
  %518 = vmatmul.f32.gmra.mxu0 %v43
  %v519 = vpop.f32.mrf.mxu0
  %v520 = vadd.f32 %v491, %v519
  %521 = vmatmul.f32.gmra.mxu0 %v55
  %v522 = vpop.f32.mrf.mxu0
  %v523 = vadd.f32 %v494, %v522
  %524 = vmatmul.f32.gmra.mxu0 %v67
  %v525 = vpop.f32.mrf.mxu0
  %v526 = vadd.f32 %v497, %v525
  %527 = vdwg.mxu0
  %528 = vmatpush.msra.mxu0 %v230
  %529 = vmatpush.msra.mxu0 %v229
  %530 = vmatpush.msra.mxu0 %v228
  %531 = vmatpush.msra.mxu0 %v227
  %532 = vmatpush.msra.mxu0 %v226
  %533 = vmatpush.msra.mxu0 %v225
  %534 = vmatpush.msra.mxu0 %v224
  %535 = vmatpush.msra.mxu0 %v223
  %536 = vmatpush.msra.mxu0 %v222
  %537 = vmatpush.msra.mxu0 %v221
  %538 = vmatpush.msra.mxu0 %v220
  %539 = vmatpush.msra.mxu0 %v219
  %540 = vmatpush.msra.mxu0 %v218
  %541 = vmatpush.msra.mxu0 %v217
  %542 = vmatpush.msra.mxu0 %v216
  %543 = vmatpush.msra.mxu0 %v215
  %544 = vmatmul.f32.gmra.mxu0 %v32
  %v545 = vpop.f32.mrf.mxu0
  %v546 = vadd.f32 %v517, %v545
  %547 = vmatmul.f32.gmra.mxu0 %v44
  %v548 = vpop.f32.mrf.mxu0
  %v549 = vadd.f32 %v520, %v548
  %550 = vmatmul.f32.gmra.mxu0 %v56
  %v551 = vpop.f32.mrf.mxu0
  %v552 = vadd.f32 %v523, %v551
  %553 = vmatmul.f32.gmra.mxu0 %v68
  %v554 = vpop.f32.mrf.mxu0
  %v555 = vadd.f32 %v526, %v554
  %556 = vdwg.mxu0
  %557 = vmatpush.msra.mxu0 %v246
  %558 = vmatpush.msra.mxu0 %v245
  %559 = vmatpush.msra.mxu0 %v244
  %560 = vmatpush.msra.mxu0 %v243
  %561 = vmatpush.msra.mxu0 %v242
  %562 = vmatpush.msra.mxu0 %v241
  %563 = vmatpush.msra.mxu0 %v240
  %564 = vmatpush.msra.mxu0 %v239
  %565 = vmatpush.msra.mxu0 %v238
  %566 = vmatpush.msra.mxu0 %v237
  %567 = vmatpush.msra.mxu0 %v236
  %568 = vmatpush.msra.mxu0 %v235
  %569 = vmatpush.msra.mxu0 %v234
  %570 = vmatpush.msra.mxu0 %v233
  %571 = vmatpush.msra.mxu0 %v232
  %572 = vmatpush.msra.mxu0 %v231
  %573 = vmatmul.f32.gmra.mxu0 %v33
  %v574 = vpop.f32.mrf.mxu0
  %v575 = vadd.f32 %v546, %v574
  %576 = vmatmul.f32.gmra.mxu0 %v45
  %v577 = vpop.f32.mrf.mxu0
  %v578 = vadd.f32 %v549, %v577
  %579 = vmatmul.f32.gmra.mxu0 %v57
  %v580 = vpop.f32.mrf.mxu0
  %v581 = vadd.f32 %v552, %v580
  %582 = vmatmul.f32.gmra.mxu0 %v69
  %v583 = vpop.f32.mrf.mxu0
  %v584 = vadd.f32 %v555, %v583
  %585 = vdwg.mxu0
  %586 = vmatpush.msra.mxu0 %v262
  %587 = vmatpush.msra.mxu0 %v261
  %588 = vmatpush.msra.mxu0 %v260
  %589 = vmatpush.msra.mxu0 %v259
  %590 = vmatpush.msra.mxu0 %v258
  %591 = vmatpush.msra.mxu0 %v257
  %592 = vmatpush.msra.mxu0 %v256
  %593 = vmatpush.msra.mxu0 %v255
  %594 = vmatpush.msra.mxu0 %v254
  %595 = vmatpush.msra.mxu0 %v253
  %596 = vmatpush.msra.mxu0 %v252
  %597 = vmatpush.msra.mxu0 %v251
  %598 = vmatpush.msra.mxu0 %v250
  %599 = vmatpush.msra.mxu0 %v249
  %600 = vmatpush.msra.mxu0 %v248
  %601 = vmatpush.msra.mxu0 %v247
  %602 = vmatmul.f32.gmra.mxu0 %v34
  %v603 = vpop.f32.mrf.mxu0
  %v604 = vadd.f32 %v575, %v603
  %605 = vmatmul.f32.gmra.mxu0 %v46
  %v606 = vpop.f32.mrf.mxu0
  %v607 = vadd.f32 %v578, %v606
  %608 = vmatmul.f32.gmra.mxu0 %v58
  %v609 = vpop.f32.mrf.mxu0
  %v610 = vadd.f32 %v581, %v609
  %611 = vmatmul.f32.gmra.mxu0 %v70
  %v612 = vpop.f32.mrf.mxu0
  %v613 = vadd.f32 %v584, %v612
  %614 = vdwg.mxu0
  %v615 = vmax.f32 %v604, 0.0
  %v616 = vmax.f32 %v607, 0.0
  %v617 = vmax.f32 %v610, 0.0
  %v618 = vmax.f32 %v613, 0.0
  %v619 = vld [vmem:[%s3] sm:$0xff]
  %v620 = vld [vmem:[%s3 + $0x8] sm:$0xff]
  %v621 = vld [vmem:[%s3 + $0x10] sm:$0xff]
  %v622 = vld [vmem:[%s3 + $0x18] sm:$0xff]
  %v623 = vld [vmem:[%s3 + $0x20] sm:$0xff]
  %v624 = vld [vmem:[%s3 + $0x28] sm:$0xff]
  %v625 = vld [vmem:[%s3 + $0x30] sm:$0xff]
  %v626 = vld [vmem:[%s3 + $0x38] sm:$0xff]
  %v627 = vld [vmem:[%s4] sm:$0x1]
  %v629 = vperm.slane %v627, 0
  %vm631 = vcmask 523264
  %v633 = vsel %vm631, %v615, 0
  %v636 = vsel %vm631, %v616, 0
  %v639 = vsel %vm631, %v617, 0
  %v642 = vsel %vm631, %v618, 0
  %644 = vmatpush.msra.mxu0 0.0
  %645 = vmatpush.msra.mxu0 0.0
  %646 = vmatpush.msra.mxu0 0.0
  %647 = vmatpush.msra.mxu0 0.0
  %648 = vmatpush.msra.mxu0 0.0
  %649 = vmatpush.msra.mxu0 0.0
  %650 = vmatpush.msra.mxu0 0.0
  %651 = vmatpush.msra.mxu0 0.0
  %652 = vmatpush.msra.mxu0 %v626
  %653 = vmatpush.msra.mxu0 %v625
  %654 = vmatpush.msra.mxu0 %v624
  %655 = vmatpush.msra.mxu0 %v623
  %656 = vmatpush.msra.mxu0 %v622
  %657 = vmatpush.msra.mxu0 %v621
  %658 = vmatpush.msra.mxu0 %v620
  %659 = vmatpush.msra.mxu0 %v619
  %660 = vmatmul.f32.gmra.mxu0 %v633
  %v661 = vpop.f32.mrf.mxu0
  %v662 = vadd.f32 %v629, %v661
  %663 = vmatmul.f32.gmra.mxu0 %v636
  %v664 = vpop.f32.mrf.mxu0
  %v665 = vadd.f32 %v629, %v664
  %666 = vmatmul.f32.gmra.mxu0 %v639
  %v667 = vpop.f32.mrf.mxu0
  %v668 = vadd.f32 %v629, %v667
  %669 = vmatmul.f32.gmra.mxu0 %v642
  %v670 = vpop.f32.mrf.mxu0
  %v671 = vadd.f32 %v629, %v670
  %672 = vdwg.mxu0
  %v673 = vld [vmem:[%s5] sm:$0xff]
  %v674 = vld [vmem:[%s5 + $0x8] sm:$0xff]
  %v675 = vld [vmem:[%s5 + $0x10] sm:$0xff]
  %v676 = vld [vmem:[%s5 + $0x18] sm:$0xff]
  %v677 = vmul.f32 %v673, 0.9
  %v678 = vmul.f32 %v674, 0.9
  %v679 = vmul.f32 %v675, 0.9
  %v680 = vmul.f32 %v676, 0.9
  %v681 = vmul.f32 %v662, 0.1
  %v682 = vmul.f32 %v665, 0.1
  %v683 = vmul.f32 %v668, 0.1
  %v684 = vmul.f32 %v671, 0.1
  %vm685 = vcmask 261120
  %v687 = vsel %vm685, %v677, 0
  %v690 = vsel %vm685, %v678, 0
  %v693 = vsel %vm685, %v679, 0
  %v696 = vsel %vm685, %v680, 0
  %698 = vmatpush.msra.mxu0 0.0
  %699 = vmatpush.msra.mxu0 0.0
  %700 = vmatpush.msra.mxu0 0.0
  %701 = vmatpush.msra.mxu0 0.0
  %702 = vmatpush.msra.mxu0 0.0
  %703 = vmatpush.msra.mxu0 0.0
  %704 = vmatpush.msra.mxu0 0.0
  %705 = vmatpush.msra.mxu0 0.0
  %706 = vmatpush.msra.mxu0 0.0
  %707 = vmatpush.msra.mxu0 0.0
  %708 = vmatpush.msra.mxu0 0.0
  %709 = vmatpush.msra.mxu0 0.0
  %710 = vmatpush.msra.mxu0 %v671
  %711 = vmatpush.msra.mxu0 %v668
  %712 = vmatpush.msra.mxu0 %v665
  %713 = vmatpush.msra.mxu0 %v662
  %714 = vmatmul.f32.gmra.mxu0 %v687
  %v715 = vpop.f32.mrf.mxu0
  %v716 = vadd.f32 %v681, %v715
  %717 = vmatmul.f32.gmra.mxu0 %v690
  %v718 = vpop.f32.mrf.mxu0
  %v719 = vadd.f32 %v682, %v718
  %720 = vmatmul.f32.gmra.mxu0 %v693
  %v721 = vpop.f32.mrf.mxu0
  %v722 = vadd.f32 %v683, %v721
  %723 = vmatmul.f32.gmra.mxu0 %v696
  %v724 = vpop.f32.mrf.mxu0
  %v725 = vadd.f32 %v684, %v724
  %726 = vdwg.mxu0
  %727 = vmatpush.msra.mxu0 0.0
  %728 = vmatpush.msra.mxu0 0.0
  %729 = vmatpush.msra.mxu0 0.0
  %730 = vmatpush.msra.mxu0 0.0
  %731 = vmatpush.msra.mxu0 0.0
  %732 = vmatpush.msra.mxu0 0.0
  %733 = vmatpush.msra.mxu0 0.0
  %734 = vmatpush.msra.mxu0 0.0
  %735 = vmatpush.msra.mxu0 0.0
  %736 = vmatpush.msra.mxu0 0.0
  %737 = vmatpush.msra.mxu0 0.0
  %738 = vmatpush.msra.mxu0 0.0
  %739 = vmatpush.msra.mxu0 %v725
  %740 = vmatpush.msra.mxu0 %v722
  %741 = vmatpush.msra.mxu0 %v719
  %742 = vmatpush.msra.mxu0 %v716
  %743 = vmatmul.f32.gmra.mxu0 %v687
  %v744 = vpop.f32.mrf.mxu0
  %v745 = vadd.f32 %v681, %v744
  %746 = vmatmul.f32.gmra.mxu0 %v690
  %v747 = vpop.f32.mrf.mxu0
  %v748 = vadd.f32 %v682, %v747
  %749 = vmatmul.f32.gmra.mxu0 %v693
  %v750 = vpop.f32.mrf.mxu0
  %v751 = vadd.f32 %v683, %v750
  %752 = vmatmul.f32.gmra.mxu0 %v696
  %v753 = vpop.f32.mrf.mxu0
  %v754 = vadd.f32 %v684, %v753
  %755 = vdwg.mxu0
  %756 = vmatpush.msra.mxu0 0.0
  %757 = vmatpush.msra.mxu0 0.0
  %758 = vmatpush.msra.mxu0 0.0
  %759 = vmatpush.msra.mxu0 0.0
  %760 = vmatpush.msra.mxu0 0.0
  %761 = vmatpush.msra.mxu0 0.0
  %762 = vmatpush.msra.mxu0 0.0
  %763 = vmatpush.msra.mxu0 0.0
  %764 = vmatpush.msra.mxu0 0.0
  %765 = vmatpush.msra.mxu0 0.0
  %766 = vmatpush.msra.mxu0 0.0
  %767 = vmatpush.msra.mxu0 0.0
  %768 = vmatpush.msra.mxu0 %v754
  %769 = vmatpush.msra.mxu0 %v751
  %770 = vmatpush.msra.mxu0 %v748
  %771 = vmatpush.msra.mxu0 %v745
  %772 = vmatmul.f32.gmra.mxu0 %v687
  %v773 = vpop.f32.mrf.mxu0
  %v774 = vadd.f32 %v681, %v773
  %775 = vmatmul.f32.gmra.mxu0 %v690
  %v776 = vpop.f32.mrf.mxu0
  %v777 = vadd.f32 %v682, %v776
  %778 = vmatmul.f32.gmra.mxu0 %v693
  %v779 = vpop.f32.mrf.mxu0
  %v780 = vadd.f32 %v683, %v779
  %781 = vmatmul.f32.gmra.mxu0 %v696
  %v782 = vpop.f32.mrf.mxu0
  %v783 = vadd.f32 %v684, %v782
  %784 = vdwg.mxu0
  %785 = vmatpush.msra.mxu0 0.0
  %786 = vmatpush.msra.mxu0 0.0
  %787 = vmatpush.msra.mxu0 0.0
  %788 = vmatpush.msra.mxu0 0.0
  %789 = vmatpush.msra.mxu0 0.0
  %790 = vmatpush.msra.mxu0 0.0
  %791 = vmatpush.msra.mxu0 0.0
  %792 = vmatpush.msra.mxu0 0.0
  %793 = vmatpush.msra.mxu0 0.0
  %794 = vmatpush.msra.mxu0 0.0
  %795 = vmatpush.msra.mxu0 0.0
  %796 = vmatpush.msra.mxu0 0.0
  %797 = vmatpush.msra.mxu0 %v783
  %798 = vmatpush.msra.mxu0 %v780
  %799 = vmatpush.msra.mxu0 %v777
  %800 = vmatpush.msra.mxu0 %v774
  %801 = vmatmul.f32.gmra.mxu0 %v687
  %v802 = vpop.f32.mrf.mxu0
  %v803 = vadd.f32 %v681, %v802
  %804 = vmatmul.f32.gmra.mxu0 %v690
  %v805 = vpop.f32.mrf.mxu0
  %v806 = vadd.f32 %v682, %v805
  %807 = vmatmul.f32.gmra.mxu0 %v693
  %v808 = vpop.f32.mrf.mxu0
  %v809 = vadd.f32 %v683, %v808
  %810 = vmatmul.f32.gmra.mxu0 %v696
  %v811 = vpop.f32.mrf.mxu0
  %v812 = vadd.f32 %v684, %v811
  %813 = vdwg.mxu0
  %814 = vmatpush.msra.mxu0 0.0
  %815 = vmatpush.msra.mxu0 0.0
  %816 = vmatpush.msra.mxu0 0.0
  %817 = vmatpush.msra.mxu0 0.0
  %818 = vmatpush.msra.mxu0 0.0
  %819 = vmatpush.msra.mxu0 0.0
  %820 = vmatpush.msra.mxu0 0.0
  %821 = vmatpush.msra.mxu0 0.0
  %822 = vmatpush.msra.mxu0 0.0
  %823 = vmatpush.msra.mxu0 0.0
  %824 = vmatpush.msra.mxu0 0.0
  %825 = vmatpush.msra.mxu0 0.0
  %826 = vmatpush.msra.mxu0 %v812
  %827 = vmatpush.msra.mxu0 %v809
  %828 = vmatpush.msra.mxu0 %v806
  %829 = vmatpush.msra.mxu0 %v803
  %830 = vmatmul.f32.gmra.mxu0 %v687
  %v831 = vpop.f32.mrf.mxu0
  %v832 = vadd.f32 %v681, %v831
  %833 = vmatmul.f32.gmra.mxu0 %v690
  %v834 = vpop.f32.mrf.mxu0
  %v835 = vadd.f32 %v682, %v834
  %836 = vmatmul.f32.gmra.mxu0 %v693
  %v837 = vpop.f32.mrf.mxu0
  %v838 = vadd.f32 %v683, %v837
  %839 = vmatmul.f32.gmra.mxu0 %v696
  %v840 = vpop.f32.mrf.mxu0
  %v841 = vadd.f32 %v684, %v840
  %842 = vdwg.mxu0
  %843 = vmatpush.msra.mxu0 0.0
  %844 = vmatpush.msra.mxu0 0.0
  %845 = vmatpush.msra.mxu0 0.0
  %846 = vmatpush.msra.mxu0 0.0
  %847 = vmatpush.msra.mxu0 0.0
  %848 = vmatpush.msra.mxu0 0.0
  %849 = vmatpush.msra.mxu0 0.0
  %850 = vmatpush.msra.mxu0 0.0
  %851 = vmatpush.msra.mxu0 0.0
  %852 = vmatpush.msra.mxu0 0.0
  %853 = vmatpush.msra.mxu0 0.0
  %854 = vmatpush.msra.mxu0 0.0
  %855 = vmatpush.msra.mxu0 %v841
  %856 = vmatpush.msra.mxu0 %v838
  %857 = vmatpush.msra.mxu0 %v835
  %858 = vmatpush.msra.mxu0 %v832
  %859 = vmatmul.f32.gmra.mxu0 %v687
  %v860 = vpop.f32.mrf.mxu0
  %v861 = vadd.f32 %v681, %v860
  %862 = vmatmul.f32.gmra.mxu0 %v690
  %v863 = vpop.f32.mrf.mxu0
  %v864 = vadd.f32 %v682, %v863
  %865 = vmatmul.f32.gmra.mxu0 %v693
  %v866 = vpop.f32.mrf.mxu0
  %v867 = vadd.f32 %v683, %v866
  %868 = vmatmul.f32.gmra.mxu0 %v696
  %v869 = vpop.f32.mrf.mxu0
  %v870 = vadd.f32 %v684, %v869
  %871 = vdwg.mxu0
  %872 = vmatpush.msra.mxu0 0.0
  %873 = vmatpush.msra.mxu0 0.0
  %874 = vmatpush.msra.mxu0 0.0
  %875 = vmatpush.msra.mxu0 0.0
  %876 = vmatpush.msra.mxu0 0.0
  %877 = vmatpush.msra.mxu0 0.0
  %878 = vmatpush.msra.mxu0 0.0
  %879 = vmatpush.msra.mxu0 0.0
  %880 = vmatpush.msra.mxu0 0.0
  %881 = vmatpush.msra.mxu0 0.0
  %882 = vmatpush.msra.mxu0 0.0
  %883 = vmatpush.msra.mxu0 0.0
  %884 = vmatpush.msra.mxu0 %v870
  %885 = vmatpush.msra.mxu0 %v867
  %886 = vmatpush.msra.mxu0 %v864
  %887 = vmatpush.msra.mxu0 %v861
  %888 = vmatmul.f32.gmra.mxu0 %v687
  %v889 = vpop.f32.mrf.mxu0
  %v890 = vadd.f32 %v681, %v889
  %891 = vmatmul.f32.gmra.mxu0 %v690
  %v892 = vpop.f32.mrf.mxu0
  %v893 = vadd.f32 %v682, %v892
  %894 = vmatmul.f32.gmra.mxu0 %v693
  %v895 = vpop.f32.mrf.mxu0
  %v896 = vadd.f32 %v683, %v895
  %897 = vmatmul.f32.gmra.mxu0 %v696
  %v898 = vpop.f32.mrf.mxu0
  %v899 = vadd.f32 %v684, %v898
  %900 = vdwg.mxu0
  %901 = vmatpush.msra.mxu0 0.0
  %902 = vmatpush.msra.mxu0 0.0
  %903 = vmatpush.msra.mxu0 0.0
  %904 = vmatpush.msra.mxu0 0.0
  %905 = vmatpush.msra.mxu0 0.0
  %906 = vmatpush.msra.mxu0 0.0
  %907 = vmatpush.msra.mxu0 0.0
  %908 = vmatpush.msra.mxu0 0.0
  %909 = vmatpush.msra.mxu0 0.0
  %910 = vmatpush.msra.mxu0 0.0
  %911 = vmatpush.msra.mxu0 0.0
  %912 = vmatpush.msra.mxu0 0.0
  %913 = vmatpush.msra.mxu0 %v899
  %914 = vmatpush.msra.mxu0 %v896
  %915 = vmatpush.msra.mxu0 %v893
  %916 = vmatpush.msra.mxu0 %v890
  %917 = vmatmul.f32.gmra.mxu0 %v687
  %v918 = vpop.f32.mrf.mxu0
  %v919 = vadd.f32 %v681, %v918
  %920 = vmatmul.f32.gmra.mxu0 %v690
  %v921 = vpop.f32.mrf.mxu0
  %v922 = vadd.f32 %v682, %v921
  %923 = vmatmul.f32.gmra.mxu0 %v693
  %v924 = vpop.f32.mrf.mxu0
  %v925 = vadd.f32 %v683, %v924
  %926 = vmatmul.f32.gmra.mxu0 %v696
  %v927 = vpop.f32.mrf.mxu0
  %v928 = vadd.f32 %v684, %v927
  %929 = vdwg.mxu0
  %930 = vmatpush.msra.mxu0 0.0
  %931 = vmatpush.msra.mxu0 0.0
  %932 = vmatpush.msra.mxu0 0.0
  %933 = vmatpush.msra.mxu0 0.0
  %934 = vmatpush.msra.mxu0 0.0
  %935 = vmatpush.msra.mxu0 0.0
  %936 = vmatpush.msra.mxu0 0.0
  %937 = vmatpush.msra.mxu0 0.0
  %938 = vmatpush.msra.mxu0 0.0
  %939 = vmatpush.msra.mxu0 0.0
  %940 = vmatpush.msra.mxu0 0.0
  %941 = vmatpush.msra.mxu0 0.0
  %942 = vmatpush.msra.mxu0 %v928
  %943 = vmatpush.msra.mxu0 %v925
  %944 = vmatpush.msra.mxu0 %v922
  %945 = vmatpush.msra.mxu0 %v919
  %946 = vmatmul.f32.gmra.mxu0 %v687
  %v947 = vpop.f32.mrf.mxu0
  %v948 = vadd.f32 %v681, %v947
  %949 = vmatmul.f32.gmra.mxu0 %v690
  %v950 = vpop.f32.mrf.mxu0
  %v951 = vadd.f32 %v682, %v950
  %952 = vmatmul.f32.gmra.mxu0 %v693
  %v953 = vpop.f32.mrf.mxu0
  %v954 = vadd.f32 %v683, %v953
  %955 = vmatmul.f32.gmra.mxu0 %v696
  %v956 = vpop.f32.mrf.mxu0
  %v957 = vadd.f32 %v684, %v956
  %958 = vdwg.mxu0
  %959 = vmatpush.msra.mxu0 0.0
  %960 = vmatpush.msra.mxu0 0.0
  %961 = vmatpush.msra.mxu0 0.0
  %962 = vmatpush.msra.mxu0 0.0
  %963 = vmatpush.msra.mxu0 0.0
  %964 = vmatpush.msra.mxu0 0.0
  %965 = vmatpush.msra.mxu0 0.0
  %966 = vmatpush.msra.mxu0 0.0
  %967 = vmatpush.msra.mxu0 0.0
  %968 = vmatpush.msra.mxu0 0.0
  %969 = vmatpush.msra.mxu0 0.0
  %970 = vmatpush.msra.mxu0 0.0
  %971 = vmatpush.msra.mxu0 %v957
  %972 = vmatpush.msra.mxu0 %v954
  %973 = vmatpush.msra.mxu0 %v951
  %974 = vmatpush.msra.mxu0 %v948
  %975 = vmatmul.f32.gmra.mxu0 %v687
  %v976 = vpop.f32.mrf.mxu0
  %v977 = vadd.f32 %v681, %v976
  %978 = vmatmul.f32.gmra.mxu0 %v690
  %v979 = vpop.f32.mrf.mxu0
  %v980 = vadd.f32 %v682, %v979
  %981 = vmatmul.f32.gmra.mxu0 %v693
  %v982 = vpop.f32.mrf.mxu0
  %v983 = vadd.f32 %v683, %v982
  %984 = vmatmul.f32.gmra.mxu0 %v696
  %v985 = vpop.f32.mrf.mxu0
  %v986 = vadd.f32 %v684, %v985
  %987 = vdwg.mxu0
  %v988 = vlaneseq
  %v989 = vand.u32 %v988, 127
  %vm990 = vcmp.lt.s32.totalorder %v989, 7
  %v991 = vsel %vm990, %v977, -1e+30
  %v992 = vsel %vm990, %v980, -1e+30
  %v993 = vsel %vm990, %v983, -1e+30
  %v994 = vsel %vm990, %v986, -1e+30
  %995 = vmax.xlane.f32.xlu0 %v991
  %v996 = vpop.xlane.xlu0 %995
  %997 = vmax.xlane.f32.xlu0 %v992
  %v998 = vpop.xlane.xlu0 %997
  %999 = vmax.xlane.f32.xlu0 %v993
  %v1000 = vpop.xlane.xlu0 %999
  %1001 = vmax.xlane.f32.xlu0 %v994
  %v1002 = vpop.xlane.xlu0 %1001
  %v1003 = vsub.f32 %v991, %v996
  %v1004 = vsub.f32 %v992, %v998
  %v1005 = vsub.f32 %v993, %v1000
  %v1006 = vsub.f32 %v994, %v1002
  %v1007 = vmul.f32 %v1003, 1.442695
  %v1008 = vpow.pop %v1007
  %v1009 = vmul.f32 %v1004, 1.442695
  %v1010 = vpow.pop %v1009
  %v1011 = vmul.f32 %v1005, 1.442695
  %v1012 = vpow.pop %v1011
  %v1013 = vmul.f32 %v1006, 1.442695
  %v1014 = vpow.pop %v1013
  %v1015 = vsel %vm990, %v1008, 0.0
  %v1016 = vsel %vm990, %v1010, 0.0
  %v1017 = vsel %vm990, %v1012, 0.0
  %v1018 = vsel %vm990, %v1014, 0.0
  %1019 = vadd.xlane.f32.xlu0 %v1015
  %v1020 = vpop.xlane.xlu0 %1019
  %1021 = vadd.xlane.f32.xlu0 %v1016
  %v1022 = vpop.xlane.xlu0 %1021
  %1023 = vadd.xlane.f32.xlu0 %v1017
  %v1024 = vpop.xlane.xlu0 %1023
  %1025 = vadd.xlane.f32.xlu0 %v1018
  %v1026 = vpop.xlane.xlu0 %1025
  %v1027 = vlog2.pop %v1020
  %v1028 = vmul.f32 %v1027, 0.6931472
  %v1029 = vlog2.pop %v1022
  %v1030 = vmul.f32 %v1029, 0.6931472
  %v1031 = vlog2.pop %v1024
  %v1032 = vmul.f32 %v1031, 0.6931472
  %v1033 = vlog2.pop %v1026
  %v1034 = vmul.f32 %v1033, 0.6931472
  %v1035 = vsub.f32 %v977, %v996
  %v1036 = vsub.f32 %v980, %v998
  %v1037 = vsub.f32 %v983, %v1000
  %v1038 = vsub.f32 %v986, %v1002
  %v1039 = vsub.f32 %v1035, %v1028
  %v1040 = vsub.f32 %v1036, %v1030
  %v1041 = vsub.f32 %v1037, %v1032
  %v1042 = vsub.f32 %v1038, %v1034
  %1043 = vst [vmem:[%s6] sm:$0xff] %v1039
  %1044 = vst [vmem:[%s6 + $0x8] sm:$0xff] %v1040
  %1045 = vst [vmem:[%s6 + $0x10] sm:$0xff] %v1041
  %1046 = vst [vmem:[%s6 + $0x18] sm:$0xff] %v1042
  // Predicated region
  $region26: #{appnp_model_forward.1} parent=0 // pred_check
    _
  $region27: #{appnp_model_forward.1} parent=0 // pred_check_branch
    %1048 = sbr.rel (0) target = $region29
  $region28: #{appnp_model_forward.1} parent=0 // pred_region
    _
  $region29: #{appnp_model_forward.1} parent=0 // pred_fallthru
    _
  // Predicated region
  $region30: #{appnp_model_forward.1} parent=0 // pred_check
    _
  $region31: #{appnp_model_forward.1} parent=0 // pred_check_branch
    %1050 = sbr.rel (0) target = $region33
  $region32: #{appnp_model_forward.1} parent=0 // pred_region
    _
  $region33: #{appnp_model_forward.1} parent=0 // pred_fallthru
    _

</llo_original>
